<compile_context>
chip_gen: v6e
topology: v6e:2x2x1
jax: 0.10.0
libtpu: 0.0.40
codegen_flags: <defaults>
</compile_context>

<pallas_src>
import functools

import jax
import jax.numpy as jnp
from jax.experimental import pallas as pl
from jax.experimental.pallas import tpu as pltpu


def _round_up(x: int, m: int) -> int:
    return ((x + m - 1) // m) * m


def _gather_kernel(idx_sref, table_ref, logits_ref, *, rows):
    """Inference path: gather `rows` embedding rows into one dense (R, V) block."""
    base = pl.program_id(0) * rows
    for r in range(rows):                       # static unroll (rows is small)
        tok = idx_sref[base + r]                # SMEM scalar read
        logits_ref[r:r + 1, :] = table_ref[pl.ds(tok, 1), :]


def _loss_kernel(idx_sref, tgt_ref, table_ref, logits_ref, loss_ref, *, rows):
    """Training path: in-kernel row gather + block-vectorized cross entropy."""
    base = pl.program_id(0) * rows
    # Row gather from the VMEM-resident table into the output block.
    for r in range(rows):                       # static unroll
        tok = idx_sref[base + r]
        logits_ref[r:r + 1, :] = table_ref[pl.ds(tok, 1), :]

    # Cross entropy vectorized over the whole (rows, V) block.
    # (Block last dim equals the logical vocab dim V, so reductions run over
    #  the logical shape; demo V=128 is also exactly lane-aligned.)
    logits = logits_ref[...].astype(jnp.float32)                    # (rows, V)
    m = jnp.max(logits, axis=-1, keepdims=True)                     # (rows, 1)
    lse = jnp.log(jnp.sum(jnp.exp(logits - m), axis=-1, keepdims=True)) + m
    lane = jax.lax.broadcasted_iota(jnp.int32, logits.shape, 1)     # (rows, V)
    tgt = tgt_ref[...]                                              # (rows, 1)
    tgt_logit = jnp.sum(jnp.where(lane == tgt, logits, 0.0),
                        axis=-1, keepdims=True)                     # (rows, 1)
    loss_ref[...] = lse - tgt_logit                                 # per-row NLL


def bigram_forward(idx, table, targets=None, *, block_rows=128):
    """Mirrors BigramLanguageModel.forward.

    idx:     (B, T) int32 token ids
    table:   (V, V) float32 embedding table (nn.Embedding(vocab, vocab))
    targets: optional (B, T) int32 token ids
    Returns (logits, loss):
      - targets is None  -> logits (B, T, V), loss None
      - targets provided -> logits (B*T, V) (matches the PyTorch .view), scalar loss
    """
    B, T = idx.shape
    V = table.shape[1]
    N = B * T

    # Rows per grid step: sublane-dense multiple of 8, capped at block_rows.
    R = max(8, min(_round_up(block_rows, 8), _round_up(N, 8)))
    NB = -(-N // R)
    N_pad = NB * R

    idx_flat = idx.reshape(N).astype(jnp.int32)
    if N_pad != N:
        idx_flat = jnp.pad(idx_flat, (0, N_pad - N))

    # Whole table resident in VMEM across the grid (single DMA, block (0, 0)).
    table_spec = pl.BlockSpec((V, V), lambda i, idx_ref: (0, 0))
    logits_spec = pl.BlockSpec((R, V), lambda i, idx_ref: (i, 0))

    if targets is None:
        logits_flat = pl.pallas_call(
            functools.partial(_gather_kernel, rows=R),
            out_shape=jax.ShapeDtypeStruct((N_pad, V), table.dtype),
            grid_spec=pltpu.PrefetchScalarGridSpec(
                num_scalar_prefetch=1,
                grid=(NB,),
                in_specs=[table_spec],
                out_specs=logits_spec,
            ),
            compiler_params=pltpu.CompilerParams(
                dimension_semantics=("parallel",)),
        )(idx_flat, table)
        return logits_flat[:N].reshape(B, T, V), None

    tgt_flat = targets.reshape(N).astype(jnp.int32)
    if N_pad != N:
        tgt_flat = jnp.pad(tgt_flat, (0, N_pad - N))
    tgt_2d = tgt_flat.reshape(N_pad, 1)

    logits_flat, per_row_loss = pl.pallas_call(
        functools.partial(_loss_kernel, rows=R),
        out_shape=(
            jax.ShapeDtypeStruct((N_pad, V), table.dtype),
            jax.ShapeDtypeStruct((N_pad, 1), jnp.float32),
        ),
        grid_spec=pltpu.PrefetchScalarGridSpec(
            num_scalar_prefetch=1,
            grid=(NB,),
            in_specs=[
                pl.BlockSpec((R, 1), lambda i, idx_ref: (i, 0)),   # target slab
                table_spec,
            ],
            out_specs=(
                logits_spec,
                pl.BlockSpec((R, 1), lambda i, idx_ref: (i, 0)),   # per-row NLL
            ),
        ),
        compiler_params=pltpu.CompilerParams(
            dimension_semantics=("parallel",)),
    )(idx_flat, tgt_2d, table)

    loss = jnp.mean(per_row_loss[:N, 0])
    return logits_flat[:N], loss


if __name__ == "__main__":
    key = jax.random.PRNGKey(0)
    k_table, k_idx, k_tgt = jax.random.split(key, 3)

    # Small synthetic config: vocab chosen as 128 for lane alignment.
    V = 128   # vocab_size
    B = 2     # batch
    T = 8     # block size / sequence length

    # nn.Embedding default init: N(0, 1)
    table = jax.random.normal(k_table, (V, V), dtype=jnp.float32)
    idx = jax.random.randint(k_idx, (B, T), 0, V, dtype=jnp.int32)
    targets = jax.random.randint(k_tgt, (B, T), 0, V, dtype=jnp.int32)

    logits, loss = bigram_forward(idx, table, targets)
    jax.block_until_ready((logits, loss))

    # Pure-JAX reference check.
    ref_logits = table[idx.reshape(-1)]                                 # (N, V)
    ref_lse = jax.nn.logsumexp(ref_logits, axis=-1)
    ref_tgt = ref_logits[jnp.arange(B * T), targets.reshape(-1)]
    ref_loss = jnp.mean(ref_lse - ref_tgt)

    assert logits.shape == (B * T, V)
    assert jnp.allclose(logits, ref_logits, atol=1e-5, rtol=1e-5)
    assert jnp.allclose(loss, ref_loss, atol=1e-5, rtol=1e-5)

    # targets=None path (generation-style call): loss-free kernel variant.
    logits_no_tgt, loss_none = bigram_forward(idx, table, None)
    jax.block_until_ready(logits_no_tgt)
    assert logits_no_tgt.shape == (B, T, V)
    assert loss_none is None
    assert jnp.allclose(logits_no_tgt.reshape(B * T, V), ref_logits,
                        atol=1e-5, rtol=1e-5)

    # TODO(synk): generate()'s multinomial sampling loop is host-side control
    # flow and is intentionally not implemented as a kernel.
    print("KERNEL_OK")
</pallas_src>

<mosaic_0001>
module attributes {stable_mosaic.version = 11 : i64} {
  func.func @_loss_kernel(%arg0: i32, %arg1: memref<16xi32, #tpu.memory_space<smem>>, %arg2: memref<16x1xi32, #tpu.memory_space<vmem>>, %arg3: memref<128x128xf32, #tpu.memory_space<vmem>>, %arg4: memref<16x128xf32, #tpu.memory_space<vmem>>, %arg5: memref<16x1xf32, #tpu.memory_space<vmem>>) attributes {dimension_semantics = [#tpu.dimension_semantics<parallel>], iteration_bounds = array<i64: 1>, scalar_prefetch = 1 : i64, scratch_operands = 0 : i64, tpu.core_type = #tpu.core_type<tc>, window_params = [{transform_indices = @transform_0, window_bounds = array<i64: 16, 1>}, {pipeline_mode = #tpu.pipeline_mode<synchronous>, transform_indices = @transform_1, window_bounds = array<i64: 128, 128>}, {transform_indices = @transform_2, window_bounds = array<i64: 16, 128>}, {transform_indices = @transform_3, window_bounds = array<i64: 16, 1>}]} {
    %c16_i32 = arith.constant 16 : i32
    %0 = arith.muli %arg0, %c16_i32 : i32
    %c0_i32 = arith.constant 0 : i32
    %1 = arith.addi %0, %c0_i32 : i32
    %2 = arith.index_cast %1 : i32 to index
    %3 = memref.load %arg1[%2] : memref<16xi32, #tpu.memory_space<smem>>
    %4 = arith.index_cast %3 : i32 to index
    %c0 = arith.constant 0 : index
    %5 = vector.load %arg3[%4, %c0] : memref<128x128xf32, #tpu.memory_space<vmem>>, vector<1x128xf32>
    %c0_0 = arith.constant 0 : index
    %c0_1 = arith.constant 0 : index
    %6 = vector.load %arg4[%c0_0, %c0_1] : memref<16x128xf32, #tpu.memory_space<vmem>>, vector<1x128xf32>
    tpu.vector_store %arg4[%c0_0, %c0_1], %5 {strides = array<i32>} : memref<16x128xf32, #tpu.memory_space<vmem>>, vector<1x128xf32>,
    %c1_i32 = arith.constant 1 : i32
    %7 = arith.addi %0, %c1_i32 : i32
    %8 = arith.index_cast %7 : i32 to index
    %9 = memref.load %arg1[%8] : memref<16xi32, #tpu.memory_space<smem>>
    %10 = arith.index_cast %9 : i32 to index
    %c0_2 = arith.constant 0 : index
    %11 = vector.load %arg3[%10, %c0_2] : memref<128x128xf32, #tpu.memory_space<vmem>>, vector<1x128xf32>
    %c1 = arith.constant 1 : index
    %c0_3 = arith.constant 0 : index
    %12 = vector.load %arg4[%c1, %c0_3] : memref<16x128xf32, #tpu.memory_space<vmem>>, vector<1x128xf32>
    tpu.vector_store %arg4[%c1, %c0_3], %11 {strides = array<i32>} : memref<16x128xf32, #tpu.memory_space<vmem>>, vector<1x128xf32>,
    %c2_i32 = arith.constant 2 : i32
    %13 = arith.addi %0, %c2_i32 : i32
    %14 = arith.index_cast %13 : i32 to index
    %15 = memref.load %arg1[%14] : memref<16xi32, #tpu.memory_space<smem>>
    %16 = arith.index_cast %15 : i32 to index
    %c0_4 = arith.constant 0 : index
    %17 = vector.load %arg3[%16, %c0_4] : memref<128x128xf32, #tpu.memory_space<vmem>>, vector<1x128xf32>
    %c2 = arith.constant 2 : index
    %c0_5 = arith.constant 0 : index
    %18 = vector.load %arg4[%c2, %c0_5] : memref<16x128xf32, #tpu.memory_space<vmem>>, vector<1x128xf32>
    tpu.vector_store %arg4[%c2, %c0_5], %17 {strides = array<i32>} : memref<16x128xf32, #tpu.memory_space<vmem>>, vector<1x128xf32>,
    %c3_i32 = arith.constant 3 : i32
    %19 = arith.addi %0, %c3_i32 : i32
    %20 = arith.index_cast %19 : i32 to index
    %21 = memref.load %arg1[%20] : memref<16xi32, #tpu.memory_space<smem>>
    %22 = arith.index_cast %21 : i32 to index
    %c0_6 = arith.constant 0 : index
    %23 = vector.load %arg3[%22, %c0_6] : memref<128x128xf32, #tpu.memory_space<vmem>>, vector<1x128xf32>
    %c3 = arith.constant 3 : index
    %c0_7 = arith.constant 0 : index
    %24 = vector.load %arg4[%c3, %c0_7] : memref<16x128xf32, #tpu.memory_space<vmem>>, vector<1x128xf32>
    tpu.vector_store %arg4[%c3, %c0_7], %23 {strides = array<i32>} : memref<16x128xf32, #tpu.memory_space<vmem>>, vector<1x128xf32>,
    %c4_i32 = arith.constant 4 : i32
    %25 = arith.addi %0, %c4_i32 : i32
    %26 = arith.index_cast %25 : i32 to index
    %27 = memref.load %arg1[%26] : memref<16xi32, #tpu.memory_space<smem>>
    %28 = arith.index_cast %27 : i32 to index
    %c0_8 = arith.constant 0 : index
    %29 = vector.load %arg3[%28, %c0_8] : memref<128x128xf32, #tpu.memory_space<vmem>>, vector<1x128xf32>
    %c4 = arith.constant 4 : index
    %c0_9 = arith.constant 0 : index
    %30 = vector.load %arg4[%c4, %c0_9] : memref<16x128xf32, #tpu.memory_space<vmem>>, vector<1x128xf32>
    tpu.vector_store %arg4[%c4, %c0_9], %29 {strides = array<i32>} : memref<16x128xf32, #tpu.memory_space<vmem>>, vector<1x128xf32>,
    %c5_i32 = arith.constant 5 : i32
    %31 = arith.addi %0, %c5_i32 : i32
    %32 = arith.index_cast %31 : i32 to index
    %33 = memref.load %arg1[%32] : memref<16xi32, #tpu.memory_space<smem>>
    %34 = arith.index_cast %33 : i32 to index
    %c0_10 = arith.constant 0 : index
    %35 = vector.load %arg3[%34, %c0_10] : memref<128x128xf32, #tpu.memory_space<vmem>>, vector<1x128xf32>
    %c5 = arith.constant 5 : index
    %c0_11 = arith.constant 0 : index
    %36 = vector.load %arg4[%c5, %c0_11] : memref<16x128xf32, #tpu.memory_space<vmem>>, vector<1x128xf32>
    tpu.vector_store %arg4[%c5, %c0_11], %35 {strides = array<i32>} : memref<16x128xf32, #tpu.memory_space<vmem>>, vector<1x128xf32>,
    %c6_i32 = arith.constant 6 : i32
    %37 = arith.addi %0, %c6_i32 : i32
    %38 = arith.index_cast %37 : i32 to index
    %39 = memref.load %arg1[%38] : memref<16xi32, #tpu.memory_space<smem>>
    %40 = arith.index_cast %39 : i32 to index
    %c0_12 = arith.constant 0 : index
    %41 = vector.load %arg3[%40, %c0_12] : memref<128x128xf32, #tpu.memory_space<vmem>>, vector<1x128xf32>
    %c6 = arith.constant 6 : index
    %c0_13 = arith.constant 0 : index
    %42 = vector.load %arg4[%c6, %c0_13] : memref<16x128xf32, #tpu.memory_space<vmem>>, vector<1x128xf32>
    tpu.vector_store %arg4[%c6, %c0_13], %41 {strides = array<i32>} : memref<16x128xf32, #tpu.memory_space<vmem>>, vector<1x128xf32>,
    %c7_i32 = arith.constant 7 : i32
    %43 = arith.addi %0, %c7_i32 : i32
    %44 = arith.index_cast %43 : i32 to index
    %45 = memref.load %arg1[%44] : memref<16xi32, #tpu.memory_space<smem>>
    %46 = arith.index_cast %45 : i32 to index
    %c0_14 = arith.constant 0 : index
    %47 = vector.load %arg3[%46, %c0_14] : memref<128x128xf32, #tpu.memory_space<vmem>>, vector<1x128xf32>
    %c7 = arith.constant 7 : index
    %c0_15 = arith.constant 0 : index
    %48 = vector.load %arg4[%c7, %c0_15] : memref<16x128xf32, #tpu.memory_space<vmem>>, vector<1x128xf32>
    tpu.vector_store %arg4[%c7, %c0_15], %47 {strides = array<i32>} : memref<16x128xf32, #tpu.memory_space<vmem>>, vector<1x128xf32>,
    %c8_i32 = arith.constant 8 : i32
    %49 = arith.addi %0, %c8_i32 : i32
    %50 = arith.index_cast %49 : i32 to index
    %51 = memref.load %arg1[%50] : memref<16xi32, #tpu.memory_space<smem>>
    %52 = arith.index_cast %51 : i32 to index
    %c0_16 = arith.constant 0 : index
    %53 = vector.load %arg3[%52, %c0_16] : memref<128x128xf32, #tpu.memory_space<vmem>>, vector<1x128xf32>
    %c8 = arith.constant 8 : index
    %c0_17 = arith.constant 0 : index
    %54 = vector.load %arg4[%c8, %c0_17] : memref<16x128xf32, #tpu.memory_space<vmem>>, vector<1x128xf32>
    tpu.vector_store %arg4[%c8, %c0_17], %53 {strides = array<i32>} : memref<16x128xf32, #tpu.memory_space<vmem>>, vector<1x128xf32>,
    %c9_i32 = arith.constant 9 : i32
    %55 = arith.addi %0, %c9_i32 : i32
    %56 = arith.index_cast %55 : i32 to index
    %57 = memref.load %arg1[%56] : memref<16xi32, #tpu.memory_space<smem>>
    %58 = arith.index_cast %57 : i32 to index
    %c0_18 = arith.constant 0 : index
    %59 = vector.load %arg3[%58, %c0_18] : memref<128x128xf32, #tpu.memory_space<vmem>>, vector<1x128xf32>
    %c9 = arith.constant 9 : index
    %c0_19 = arith.constant 0 : index
    %60 = vector.load %arg4[%c9, %c0_19] : memref<16x128xf32, #tpu.memory_space<vmem>>, vector<1x128xf32>
    tpu.vector_store %arg4[%c9, %c0_19], %59 {strides = array<i32>} : memref<16x128xf32, #tpu.memory_space<vmem>>, vector<1x128xf32>,
    %c10_i32 = arith.constant 10 : i32
    %61 = arith.addi %0, %c10_i32 : i32
    %62 = arith.index_cast %61 : i32 to index
    %63 = memref.load %arg1[%62] : memref<16xi32, #tpu.memory_space<smem>>
    %64 = arith.index_cast %63 : i32 to index
    %c0_20 = arith.constant 0 : index
    %65 = vector.load %arg3[%64, %c0_20] : memref<128x128xf32, #tpu.memory_space<vmem>>, vector<1x128xf32>
    %c10 = arith.constant 10 : index
    %c0_21 = arith.constant 0 : index
    %66 = vector.load %arg4[%c10, %c0_21] : memref<16x128xf32, #tpu.memory_space<vmem>>, vector<1x128xf32>
    tpu.vector_store %arg4[%c10, %c0_21], %65 {strides = array<i32>} : memref<16x128xf32, #tpu.memory_space<vmem>>, vector<1x128xf32>,
    %c11_i32 = arith.constant 11 : i32
    %67 = arith.addi %0, %c11_i32 : i32
    %68 = arith.index_cast %67 : i32 to index
    %69 = memref.load %arg1[%68] : memref<16xi32, #tpu.memory_space<smem>>
    %70 = arith.index_cast %69 : i32 to index
    %c0_22 = arith.constant 0 : index
    %71 = vector.load %arg3[%70, %c0_22] : memref<128x128xf32, #tpu.memory_space<vmem>>, vector<1x128xf32>
    %c11 = arith.constant 11 : index
    %c0_23 = arith.constant 0 : index
    %72 = vector.load %arg4[%c11, %c0_23] : memref<16x128xf32, #tpu.memory_space<vmem>>, vector<1x128xf32>
    tpu.vector_store %arg4[%c11, %c0_23], %71 {strides = array<i32>} : memref<16x128xf32, #tpu.memory_space<vmem>>, vector<1x128xf32>,
    %c12_i32 = arith.constant 12 : i32
    %73 = arith.addi %0, %c12_i32 : i32
    %74 = arith.index_cast %73 : i32 to index
    %75 = memref.load %arg1[%74] : memref<16xi32, #tpu.memory_space<smem>>
    %76 = arith.index_cast %75 : i32 to index
    %c0_24 = arith.constant 0 : index
    %77 = vector.load %arg3[%76, %c0_24] : memref<128x128xf32, #tpu.memory_space<vmem>>, vector<1x128xf32>
    %c12 = arith.constant 12 : index
    %c0_25 = arith.constant 0 : index
    %78 = vector.load %arg4[%c12, %c0_25] : memref<16x128xf32, #tpu.memory_space<vmem>>, vector<1x128xf32>
    tpu.vector_store %arg4[%c12, %c0_25], %77 {strides = array<i32>} : memref<16x128xf32, #tpu.memory_space<vmem>>, vector<1x128xf32>,
    %c13_i32 = arith.constant 13 : i32
    %79 = arith.addi %0, %c13_i32 : i32
    %80 = arith.index_cast %79 : i32 to index
    %81 = memref.load %arg1[%80] : memref<16xi32, #tpu.memory_space<smem>>
    %82 = arith.index_cast %81 : i32 to index
    %c0_26 = arith.constant 0 : index
    %83 = vector.load %arg3[%82, %c0_26] : memref<128x128xf32, #tpu.memory_space<vmem>>, vector<1x128xf32>
    %c13 = arith.constant 13 : index
    %c0_27 = arith.constant 0 : index
    %84 = vector.load %arg4[%c13, %c0_27] : memref<16x128xf32, #tpu.memory_space<vmem>>, vector<1x128xf32>
    tpu.vector_store %arg4[%c13, %c0_27], %83 {strides = array<i32>} : memref<16x128xf32, #tpu.memory_space<vmem>>, vector<1x128xf32>,
    %c14_i32 = arith.constant 14 : i32
    %85 = arith.addi %0, %c14_i32 : i32
    %86 = arith.index_cast %85 : i32 to index
    %87 = memref.load %arg1[%86] : memref<16xi32, #tpu.memory_space<smem>>
    %88 = arith.index_cast %87 : i32 to index
    %c0_28 = arith.constant 0 : index
    %89 = vector.load %arg3[%88, %c0_28] : memref<128x128xf32, #tpu.memory_space<vmem>>, vector<1x128xf32>
    %c14 = arith.constant 14 : index
    %c0_29 = arith.constant 0 : index
    %90 = vector.load %arg4[%c14, %c0_29] : memref<16x128xf32, #tpu.memory_space<vmem>>, vector<1x128xf32>
    tpu.vector_store %arg4[%c14, %c0_29], %89 {strides = array<i32>} : memref<16x128xf32, #tpu.memory_space<vmem>>, vector<1x128xf32>,
    %c15_i32 = arith.constant 15 : i32
    %91 = arith.addi %0, %c15_i32 : i32
    %92 = arith.index_cast %91 : i32 to index
    %93 = memref.load %arg1[%92] : memref<16xi32, #tpu.memory_space<smem>>
    %94 = arith.index_cast %93 : i32 to index
    %c0_30 = arith.constant 0 : index
    %95 = vector.load %arg3[%94, %c0_30] : memref<128x128xf32, #tpu.memory_space<vmem>>, vector<1x128xf32>
    %c15 = arith.constant 15 : index
    %c0_31 = arith.constant 0 : index
    %96 = vector.load %arg4[%c15, %c0_31] : memref<16x128xf32, #tpu.memory_space<vmem>>, vector<1x128xf32>
    tpu.vector_store %arg4[%c15, %c0_31], %95 {strides = array<i32>} : memref<16x128xf32, #tpu.memory_space<vmem>>, vector<1x128xf32>,
    %c0_32 = arith.constant 0 : index
    %c0_33 = arith.constant 0 : index
    %97 = vector.load %arg4[%c0_32, %c0_33] : memref<16x128xf32, #tpu.memory_space<vmem>>, vector<16x128xf32>
    %cst = arith.constant dense<0xFF800000> : vector<16xf32>
    %98 = vector.multi_reduction <maximumf>, %97, %cst [1] : vector<16x128xf32> to vector<16xf32>
    %99 = vector.shape_cast %98 : vector<16xf32> to vector<16x1xf32>
    %100 = vector.broadcast %99 : vector<16x1xf32> to vector<16x128xf32>
    %101 = arith.subf %97, %100 : vector<16x128xf32>
    %102 = math.exp %101 : vector<16x128xf32>
    %cst_34 = arith.constant dense<0.000000e+00> : vector<16xf32>
    %103 = vector.multi_reduction <add>, %102, %cst_34 [1] : vector<16x128xf32> to vector<16xf32>
    %104 = vector.shape_cast %103 : vector<16xf32> to vector<16x1xf32>
    %105 = math.log %104 : vector<16x1xf32>
    %106 = arith.addf %105, %99 : vector<16x1xf32>
    %107 = tpu.iota {dimensions = array<i32: 1>} : vector<16x128xi32>
    %c0_35 = arith.constant 0 : index
    %c0_36 = arith.constant 0 : index
    %108 = vector.load %arg2[%c0_35, %c0_36] : memref<16x1xi32, #tpu.memory_space<vmem>>, vector<16x1xi32>
    %109 = vector.broadcast %108 : vector<16x1xi32> to vector<16x128xi32>
    %110 = arith.cmpi eq, %107, %109 : vector<16x128xi32>
    %cst_37 = arith.constant 0.000000e+00 : f32
    %111 = vector.broadcast %cst_37 : f32 to vector<16x128xf32>
    %112 = arith.select %110, %97, %111 : vector<16x128xi1>, vector<16x128xf32>
    %cst_38 = arith.constant dense<0.000000e+00> : vector<16xf32>
    %113 = vector.multi_reduction <add>, %112, %cst_38 [1] : vector<16x128xf32> to vector<16xf32>
    %114 = vector.shape_cast %113 : vector<16xf32> to vector<16x1xf32>
    %115 = arith.subf %106, %114 : vector<16x1xf32>
    %c0_39 = arith.constant 0 : index
    %c0_40 = arith.constant 0 : index
    %116 = vector.load %arg5[%c0_39, %c0_40] : memref<16x1xf32, #tpu.memory_space<vmem>>, vector<16x1xf32>
    tpu.vector_store %arg5[%c0_39, %c0_40], %115 {strides = array<i32>} : memref<16x1xf32, #tpu.memory_space<vmem>>, vector<16x1xf32>,
    return
  }
  func.func @transform_0(%arg0: i32, %arg1: memref<16xi32, #tpu.memory_space<smem>>) -> (i32, i32) {
    %c0_i32 = arith.constant 0 : i32
    %c0_i32_0 = arith.constant 0 : i32
    return %arg0, %c0_i32 : i32, i32
  }
  func.func @transform_1(%arg0: i32, %arg1: memref<16xi32, #tpu.memory_space<smem>>) -> (i32, i32) {
    %c0_i32 = arith.constant 0 : i32
    %c0_i32_0 = arith.constant 0 : i32
    %c0_i32_1 = arith.constant 0 : i32
    return %c0_i32, %c0_i32_0 : i32, i32
  }
  func.func @transform_2(%arg0: i32, %arg1: memref<16xi32, #tpu.memory_space<smem>>) -> (i32, i32) {
    %c0_i32 = arith.constant 0 : i32
    %c0_i32_0 = arith.constant 0 : i32
    return %arg0, %c0_i32 : i32, i32
  }
  func.func @transform_3(%arg0: i32, %arg1: memref<16xi32, #tpu.memory_space<smem>>) -> (i32, i32) {
    %c0_i32 = arith.constant 0 : i32
    %c0_i32_0 = arith.constant 0 : i32
    return %arg0, %c0_i32 : i32, i32
  }
}

</mosaic_0001>

<llo_original>
// kernel: tpu_custom_call.1
$region0: #{tpu_custom_call.1}
  #allocation0 [shape = 'u32[]', space=smem, size = 0x4, offset = 0x4, fixed_abs, tag = 'smem constant byte address 0x4 - core index']
  #allocation1 [shape = 'u32[144,128]{1,0:T(1,128)}', space=vmem, size = 0x12000, scoped, tag = 'internal scratch']
  #allocation2 [shape = 's32[1]{0}', space=sflag, size = 0x4, scoped, tag = 'scoped memory for tpu_custom_call.1']
  #allocation3 [shape = 'u8[512]{0}', space=smem, size = 0x200, scoped, tag = 'prefetched SMEM operand 0']
  %s0 = inlined_call_operand.vmem [shape: s32[16], index: 0, kind: input, shape index: {}]
  %s1 = inlined_call_operand.vmem [shape: s32[16,1], index: 1, kind: input, shape index: {}]
  %s2 = inlined_call_operand.hbm [shape: f32[128,128], index: 2, kind: input, shape index: {}]
  %s3 = inlined_call_operand.hbm [shape: f32[16,128], index: 3, kind: output, shape index: {0}]
  %s4 = inlined_call_operand.vmem [shape: f32[16,1], index: 4, kind: output, shape index: {1}]
  %5 = xla_tuple %s3, %s4
  %s6 = sld [smem:[#allocation0]]
  $region30: #{tpu_custom_call.1} parent=0
    _
  %s8 = ssub.s32 1, %s6
  %s9 = scalar_select 0, %s8, %s6
  %s10 = sshll.u32 %s0, 4
  %s11 = int_to_ptr.vmem [resolvable:$true] %s10
  %13 = dma.vmem_to_smem %s11, 16, [#allocation3], [#allocation2]
  %14 = dma.done [#allocation2], 16
  %15 = sfence
  $region1: #{tpu_custom_call.1} parent=0
    #allocation4 [shape = 'u8[65536]{0}', space=vmem, size = 0x10000, scoped, tag = 'input window, operand 2, single buffered']
    #allocation5 [shape = 's32[1]{0}', space=sflag, size = 0x4, scoped, tag = 'scoped memory for tpu_custom_call.1']
    #allocation6 [shape = 's32[1]{0}', space=sflag, size = 0x4, scoped, tag = 'scoped memory for tpu_custom_call.1']
    #allocation7 [shape = 'u8[8192]{0}', space=vmem, size = 0x2000, scoped, tag = 'output window, operand 0, single buffered']
    %16 = vsyncpa [#allocation5], 0
    %17 = vsyncpa [#allocation6], 0
    // Predicated region
    $region2: #{tpu_custom_call.1} parent=1 // pred_check
      _
    $region3: #{tpu_custom_call.1} parent=1 // pred_check_branch
      %19 = sbr.rel (0) target = $region5
    $region4: #{tpu_custom_call.1} parent=1 // pred_region
      _
    $region5: #{tpu_custom_call.1} parent=1 // pred_fallthru
      _
    // Predicated region
    $region6: #{tpu_custom_call.1} parent=1 // pred_check
      _
    $region7: #{tpu_custom_call.1} parent=1 // pred_check_branch
      %21 = sbr.rel (0) target = $region9
    $region8: #{tpu_custom_call.1} parent=1 // pred_region
      %s23 = ssub.s32 2048, 2048
      %24 = vsyncadd [#allocation5], %s23
      %s25 = sshll.u32 [#allocation4], 4
      %s26 = int_to_ptr.vmem [resolvable:$true] %s25
      %31 = dma.hbm_to_vmem [thread:$0]  %s2, 2048, %s26, [#allocation5], 128, 128, 8
    $region9: #{tpu_custom_call.1} parent=1 // pred_fallthru
      _
    // Predicated region
    $region10: #{tpu_custom_call.1} parent=1 // pred_check
      _
    $region11: #{tpu_custom_call.1} parent=1 // pred_check_branch
      %33 = sbr.rel (0) target = $region13
    $region12: #{tpu_custom_call.1} parent=1 // pred_region
      %34 = dma.done [#allocation5], 2048
    $region13: #{tpu_custom_call.1} parent=1 // pred_fallthru
      _
    %s35 = smul.u32 0, 16
    %s36 = sld [smem:[#allocation3 + %s35]]
    %s37 = scalar_lea.vmem [#allocation4], %s36
    %v38 = vld [vmem:[%s37] sm:$0x1]
    %39 = vst [vmem:[#allocation7] sm:$0x1] %v38
    %s40 = sadd.s32 %s35, 1
    %s41 = sld [smem:[#allocation3 + %s40]]
    %s42 = scalar_lea.vmem [#allocation4], %s41
    %v43 = vld [vmem:[%s42] sm:$0x1]
    %44 = vst [vmem:[#allocation7 + $0x1] sm:$0x1] %v43
    %s45 = sadd.s32 %s35, 2
    %s46 = sld [smem:[#allocation3 + %s45]]
    %s47 = scalar_lea.vmem [#allocation4], %s46
    %v48 = vld [vmem:[%s47] sm:$0x1]
    %49 = vst [vmem:[#allocation7 + $0x2] sm:$0x1] %v48
    %s50 = sadd.s32 %s35, 3
    %s51 = sld [smem:[#allocation3 + %s50]]
    %s52 = scalar_lea.vmem [#allocation4], %s51
    %v53 = vld [vmem:[%s52] sm:$0x1]
    %54 = vst [vmem:[#allocation7 + $0x3] sm:$0x1] %v53
    %s55 = sadd.s32 %s35, 4
    %s56 = sld [smem:[#allocation3 + %s55]]
    %s57 = scalar_lea.vmem [#allocation4], %s56
    %v58 = vld [vmem:[%s57] sm:$0x1]
    %59 = vst [vmem:[#allocation7 + $0x4] sm:$0x1] %v58
    %s60 = sadd.s32 %s35, 5
    %s61 = sld [smem:[#allocation3 + %s60]]
    %s62 = scalar_lea.vmem [#allocation4], %s61
    %v63 = vld [vmem:[%s62] sm:$0x1]
    %64 = vst [vmem:[#allocation7 + $0x5] sm:$0x1] %v63
    %s65 = sadd.s32 %s35, 6
    %s66 = sld [smem:[#allocation3 + %s65]]
    %s67 = scalar_lea.vmem [#allocation4], %s66
    %v68 = vld [vmem:[%s67] sm:$0x1]
    %69 = vst [vmem:[#allocation7 + $0x6] sm:$0x1] %v68
    %s70 = sadd.s32 %s35, 7
    %s71 = sld [smem:[#allocation3 + %s70]]
    %s72 = scalar_lea.vmem [#allocation4], %s71
    %v73 = vld [vmem:[%s72] sm:$0x1]
    %74 = vst [vmem:[#allocation7 + $0x7] sm:$0x1] %v73
    %s75 = sadd.s32 %s35, 8
    %s76 = sld [smem:[#allocation3 + %s75]]
    %s77 = scalar_lea.vmem [#allocation4], %s76
    %v78 = vld [vmem:[%s77] sm:$0x1]
    %79 = vst [vmem:[#allocation7 + $0x8] sm:$0x1] %v78
    %s80 = sadd.s32 %s35, 9
    %s81 = sld [smem:[#allocation3 + %s80]]
    %s82 = scalar_lea.vmem [#allocation4], %s81
    %v83 = vld [vmem:[%s82] sm:$0x1]
    %84 = vst [vmem:[#allocation7 + $0x9] sm:$0x1] %v83
    %s85 = sadd.s32 %s35, 10
    %s86 = sld [smem:[#allocation3 + %s85]]
    %s87 = scalar_lea.vmem [#allocation4], %s86
    %v88 = vld [vmem:[%s87] sm:$0x1]
    %89 = vst [vmem:[#allocation7 + $0xa] sm:$0x1] %v88
    %s90 = sadd.s32 %s35, 11
    %s91 = sld [smem:[#allocation3 + %s90]]
    %s92 = scalar_lea.vmem [#allocation4], %s91
    %v93 = vld [vmem:[%s92] sm:$0x1]
    %94 = vst [vmem:[#allocation7 + $0xb] sm:$0x1] %v93
    %s95 = sadd.s32 %s35, 12
    %s96 = sld [smem:[#allocation3 + %s95]]
    %s97 = scalar_lea.vmem [#allocation4], %s96
    %v98 = vld [vmem:[%s97] sm:$0x1]
    %99 = vst [vmem:[#allocation7 + $0xc] sm:$0x1] %v98
    %s100 = sadd.s32 %s35, 13
    %s101 = sld [smem:[#allocation3 + %s100]]
    %s102 = scalar_lea.vmem [#allocation4], %s101
    %v103 = vld [vmem:[%s102] sm:$0x1]
    %104 = vst [vmem:[#allocation7 + $0xd] sm:$0x1] %v103
    %s105 = sadd.s32 %s35, 14
    %s106 = sld [smem:[#allocation3 + %s105]]
    %s107 = scalar_lea.vmem [#allocation4], %s106
    %v108 = vld [vmem:[%s107] sm:$0x1]
    %109 = vst [vmem:[#allocation7 + $0xe] sm:$0x1] %v108
    %s110 = sadd.s32 %s35, 15
    %s111 = sld [smem:[#allocation3 + %s110]]
    %s112 = scalar_lea.vmem [#allocation4], %s111
    %v113 = vld [vmem:[%s112] sm:$0x1]
    %114 = vst [vmem:[#allocation7 + $0xf] sm:$0x1] %v113
    %v115 = vld [vmem:[#allocation7] sm:$0xff]
    %v116 = vld [vmem:[#allocation7 + $0x8] sm:$0xff]
    %117 = vmax.xlane.f32.xlu0 %v115
    %v118 = vpop.xlane.xlu0 %117
    %119 = vmax.xlane.f32.xlu0 %v116
    %v120 = vpop.xlane.xlu0 %119
    %v121 = vsub.f32 %v115, %v118
    %v122 = vsub.f32 %v116, %v120
    %v123 = vmul.f32 %v121, 1.442695
    %v124 = vpow.pop %v123
    %v125 = vmul.f32 %v122, 1.442695
    %v126 = vpow.pop %v125
    %127 = vadd.xlane.f32.xlu0 %v124
    %v128 = vpop.xlane.xlu0 %127
    %129 = vadd.xlane.f32.xlu0 %v126
    %v130 = vpop.xlane.xlu0 %129
    %v131 = vlog2.pop %v128
    %v132 = vmul.f32 %v131, 0.6931472
    %v133 = vlog2.pop %v130
    %v134 = vmul.f32 %v133, 0.6931472
    %v135 = vadd.f32 %v132, %v118
    %v136 = vadd.f32 %v134, %v120
    %v137 = vlaneseq
    %v138 = vand.u32 %v137, 127
    %v139 = vld [vmem:[%s1] sm:$0xff]
    %v140 = vld [vmem:[%s1 + $0x8] sm:$0xff]
    %141 = vset.pattern.permute.xlu0 0
    %142 = vperm.xlu0 %141, %v139
    %v143 = vpop.permute.xlu0 %142
    %144 = vset.pattern.permute.xlu0 0
    %145 = vperm.xlu0 %144, %v140
    %v146 = vpop.permute.xlu0 %145
    %vm147 = vcmp.eq.s32.totalorder %v138, %v143
    %vm148 = vcmp.eq.s32.totalorder %v138, %v146
    %v149 = vsel %vm147, %v115, 0.0
    %v150 = vsel %vm148, %v116, 0.0
    %151 = vadd.xlane.f32.xlu0 %v149
    %v152 = vpop.xlane.xlu0 %151
    %153 = vadd.xlane.f32.xlu0 %v150
    %v154 = vpop.xlane.xlu0 %153
    %v155 = vsub.f32 %v135, %v152
    %v156 = vsub.f32 %v136, %v154
    %vm157 = vcmask 7168
    %158 = vst.msk [vmem:[%s4] sm:$0xff] %vm157, %v155
    %159 = vst.msk [vmem:[%s4 + $0x8] sm:$0xff] %vm157, %v156
    // Predicated region
    $region14: #{tpu_custom_call.1} parent=1 // pred_check
      _
    $region15: #{tpu_custom_call.1} parent=1 // pred_check_branch
      %161 = sbr.rel (0) target = $region17
    $region16: #{tpu_custom_call.1} parent=1 // pred_region
      %s163 = ssub.s32 256, 256
      %164 = vsyncadd [#allocation6], %s163
      %s165 = sshll.u32 [#allocation7], 4
      %s166 = int_to_ptr.vmem [resolvable:$true] %s165
      %171 = dma.vmem_to_hbm [thread:$0]  %s166, 256, %s3, [#allocation6], 128, 128, 8
    $region17: #{tpu_custom_call.1} parent=1 // pred_fallthru
      _
    // Predicated region
    $region18: #{tpu_custom_call.1} parent=1 // pred_check
      _
    $region19: #{tpu_custom_call.1} parent=1 // pred_check_branch
      %173 = sbr.rel (0) target = $region21
    $region20: #{tpu_custom_call.1} parent=1 // pred_region
      _
    $region21: #{tpu_custom_call.1} parent=1 // pred_fallthru
      _
    // Predicated region
    $region22: #{tpu_custom_call.1} parent=1 // pred_check
      _
    $region23: #{tpu_custom_call.1} parent=1 // pred_check_branch
      %175 = sbr.rel (0) target = $region25
    $region24: #{tpu_custom_call.1} parent=1 // pred_region
      %176 = dma.done [#allocation6], 256
    $region25: #{tpu_custom_call.1} parent=1 // pred_fallthru
      _
    // Predicated region
    $region26: #{tpu_custom_call.1} parent=1 // pred_check
      _
    $region27: #{tpu_custom_call.1} parent=1 // pred_check_branch
      %178 = sbr.rel (0) target = $region29
    $region28: #{tpu_custom_call.1} parent=1 // pred_region
      _
    $region29: #{tpu_custom_call.1} parent=1 // pred_fallthru
      _
    %179 = vsyncpa [#allocation5], 1
    %180 = vsyncpa [#allocation6], 1

</llo_original>
